<compile_context>
chip_gen: v7x
topology: tpu7x:2x2x1
jax: 0.10.0
libtpu: 0.0.40
codegen_flags: <defaults>
</compile_context>

<pallas_src>
import functools
import math

import jax
import jax.numpy as jnp
from jax.experimental import pallas as pl
from jax.experimental.pallas import tpu as pltpu

LANE = 128


def _round_up(x, m):
    return (x + m - 1) // m * m


# --------------------------- in-kernel helpers --------------------------------

def _sigmoid(x):
    # exp and the approximate reciprocal both issue on the EUP slot.
    return pl.reciprocal(1.0 + jnp.exp(-x), approx=True)


def _silu(x):
    return x * _sigmoid(x)


# --------------------------- Pallas kernels -----------------------------------

def _matmul_affine_act_kernel(x_ref, w_ref, s_ref, b_ref, o_ref, *, act):
    """o = act((x @ w) * scale + bias); bf16 MXU operands, f32 accumulate."""
    y = jnp.dot(x_ref[...].astype(jnp.bfloat16), w_ref[...],
                preferred_element_type=jnp.float32)
    y = y * s_ref[...] + b_ref[...]
    if act == "silu":
        y = _silu(y)
    o_ref[...] = y


@functools.partial(jax.jit, static_argnames=("act",))
def matmul_affine_act(x, w, scale, bias, *, act="none"):
    """x:[M,K] f32, w:[K,N] bf16, scale/bias:[N] f32 -> [M,N] f32."""
    M, K = x.shape
    N = w.shape[1]
    TM = min(256, _round_up(M, 8))
    M_pad = _round_up(M, TM)
    if M_pad != M:
        x = jnp.pad(x, ((0, M_pad - M), (0, 0)))
    out = pl.pallas_call(
        functools.partial(_matmul_affine_act_kernel, act=act),
        out_shape=jax.ShapeDtypeStruct((M_pad, N), jnp.float32),
        grid=(M_pad // TM,),
        in_specs=[
            pl.BlockSpec((TM, K), lambda i: (i, 0)),
            pl.BlockSpec((K, N), lambda i: (0, 0)),
            pl.BlockSpec((1, N), lambda i: (0, 0)),
            pl.BlockSpec((1, N), lambda i: (0, 0)),
        ],
        out_specs=pl.BlockSpec((TM, N), lambda i: (i, 0)),
        compiler_params=pltpu.CompilerParams(
            dimension_semantics=("parallel",)),
    )(x, w, scale.reshape(1, N), bias.reshape(1, N))
    return out[:M] if M_pad != M else out


def _dwconv_kernel(x_ref, w_ref, s_ref, b_ref, o_ref, *, k, stride, Ho, Wo):
    """Depthwise kxk conv + BN affine + SiLU on one (batch, channel-tile) block.

    x_ref holds the zero-padded activation (stride 1) or its 2x2 phase
    decomposition stacked along rows (stride 2); the k*k taps are accumulated
    from shifted static windows -> no im2col, no sublane-axis reduction.
    """
    hq = Ho + (k - 1) // 2            # rows per phase in the stride-2 layout
    acc = None
    for dy in range(k):
        for dx in range(k):
            if stride == 1:
                r0, c0 = dy, dx
            else:
                ph = (dy % 2) * 2 + (dx % 2)
                r0, c0 = ph * hq + dy // 2, dx // 2
            tap = x_ref[0, r0:r0 + Ho, c0:c0 + Wo, :]
            term = tap * w_ref[dy * k + dx, :]
            acc = term if acc is None else acc + term
    y = acc * s_ref[0, :] + b_ref[0, :]
    o_ref[0] = _silu(y)


@functools.partial(jax.jit, static_argnames=("k", "stride"))
def dwconv_bn_silu(x, w, scale, bias, *, k, stride):
    """x:[N,H,W,C] (C % 128 == 0), w:[k*k,C], scale/bias:[C] -> [N,Ho,Wo,C]."""
    N, H, W, C = x.shape
    p = k // 2
    Ho = (H + 2 * p - k) // stride + 1
    Wo = (W + 2 * p - k) // stride + 1
    if stride == 1:
        xin = jnp.pad(x, ((0, 0), (p, p), (p, p), (0, 0)))
    else:  # stride 2: 2x2 phase decomposition (single pass, no k^2 HBM blow-up)
        Hq = Ho + (k - 1) // 2
        Wq = Wo + (k - 1) // 2
        xp = jnp.pad(x, ((0, 0), (p, 2 * Hq - H - p), (p, 2 * Wq - W - p), (0, 0)))
        xin = xp.reshape(N, Hq, 2, Wq, 2, C).transpose(0, 2, 4, 1, 3, 5)
        xin = xin.reshape(N, 4 * Hq, Wq, C)
    HR, WR = xin.shape[1], xin.shape[2]
    CT = LANE
    return pl.pallas_call(
        functools.partial(_dwconv_kernel, k=k, stride=stride, Ho=Ho, Wo=Wo),
        out_shape=jax.ShapeDtypeStruct((N, Ho, Wo, C), jnp.float32),
        grid=(N, C // CT),
        in_specs=[
            pl.BlockSpec((1, HR, WR, CT), lambda n, c: (n, 0, 0, c)),
            pl.BlockSpec((k * k, CT), lambda n, c: (0, c)),
            pl.BlockSpec((1, CT), lambda n, c: (0, c)),
            pl.BlockSpec((1, CT), lambda n, c: (0, c)),
        ],
        out_specs=pl.BlockSpec((1, Ho, Wo, CT), lambda n, c: (n, 0, 0, c)),
        compiler_params=pltpu.CompilerParams(
            dimension_semantics=("parallel", "parallel")),
    )(xin, w, scale.reshape(1, C), bias.reshape(1, C))


def _se_gate_kernel(h_ref, w1_ref, b1_ref, w2_ref, b2_ref, g_ref):
    """Fused SE branch: global mean pool -> fc1 + SiLU -> fc2 + sigmoid."""
    pooled = jnp.mean(h_ref[0], axis=0, keepdims=True)            # [1, C]
    a = jnp.dot(pooled.astype(jnp.bfloat16), w1_ref[...],
                preferred_element_type=jnp.float32) + b1_ref[...]
    a = _silu(a)
    g = jnp.dot(a.astype(jnp.bfloat16), w2_ref[...],
                preferred_element_type=jnp.float32) + b2_ref[...]
    g_ref[0] = _sigmoid(g)


@jax.jit
def se_gate(h, w1, b1, w2, b2):
    """h:[N,P,C] -> gate:[N,1,C]."""
    N, P, C = h.shape
    R = w1.shape[1]
    return pl.pallas_call(
        _se_gate_kernel,
        out_shape=jax.ShapeDtypeStruct((N, 1, C), jnp.float32),
        grid=(N,),
        in_specs=[
            pl.BlockSpec((1, P, C), lambda n: (n, 0, 0)),
            pl.BlockSpec((C, R), lambda n: (0, 0)),
            pl.BlockSpec((1, R), lambda n: (0, 0)),
            pl.BlockSpec((R, C), lambda n: (0, 0)),
            pl.BlockSpec((1, C), lambda n: (0, 0)),
        ],
        out_specs=pl.BlockSpec((1, 1, C), lambda n: (n, 0, 0)),
        compiler_params=pltpu.CompilerParams(
            dimension_semantics=("parallel",)),
    )(h, w1, b1.reshape(1, R), w2, b2.reshape(1, C))


def _gate_proj_kernel(h_ref, g_ref, w_ref, s_ref, b_ref, o_ref):
    h = h_ref[0] * g_ref[0]
    y = jnp.dot(h.astype(jnp.bfloat16), w_ref[...],
                preferred_element_type=jnp.float32)
    o_ref[0] = y * s_ref[...] + b_ref[...]


def _gate_proj_res_kernel(h_ref, g_ref, w_ref, s_ref, b_ref, sc_ref, o_ref):
    h = h_ref[0] * g_ref[0]
    y = jnp.dot(h.astype(jnp.bfloat16), w_ref[...],
                preferred_element_type=jnp.float32)
    o_ref[0] = y * s_ref[...] + b_ref[...] + sc_ref[0]


@jax.jit
def gate_proj_bn(h, gate, w, scale, bias, shortcut=None):
    """Fused MBConv tail: (h * SE gate) @ w_proj * scale + bias (+ shortcut)."""
    N, P, Cm = h.shape
    Co = w.shape[1]
    TP = min(256, _round_up(P, 8))
    P_pad = _round_up(P, TP)
    if P_pad != P:
        h = jnp.pad(h, ((0, 0), (0, P_pad - P), (0, 0)))
        if shortcut is not None:
            shortcut = jnp.pad(shortcut, ((0, 0), (0, P_pad - P), (0, 0)))
    in_specs = [
        pl.BlockSpec((1, TP, Cm), lambda n, p: (n, p, 0)),
        pl.BlockSpec((1, 1, Cm), lambda n, p: (n, 0, 0)),
        pl.BlockSpec((Cm, Co), lambda n, p: (0, 0)),
        pl.BlockSpec((1, Co), lambda n, p: (0, 0)),
        pl.BlockSpec((1, Co), lambda n, p: (0, 0)),
    ]
    args = [h, gate, w, scale.reshape(1, Co), bias.reshape(1, Co)]
    if shortcut is None:
        kernel = _gate_proj_kernel
    else:
        kernel = _gate_proj_res_kernel
        in_specs.append(pl.BlockSpec((1, TP, Co), lambda n, p: (n, p, 0)))
        args.append(shortcut)
    out = pl.pallas_call(
        kernel,
        out_shape=jax.ShapeDtypeStruct((N, P_pad, Co), jnp.float32),
        grid=(N, P_pad // TP),
        in_specs=in_specs,
        out_specs=pl.BlockSpec((1, TP, Co), lambda n, p: (n, p, 0)),
        compiler_params=pltpu.CompilerParams(
            dimension_semantics=("parallel", "parallel")),
    )(*args)
    return out[:, :P] if P_pad != P else out


def _pool_fc_kernel(x_ref, w_ref, b_ref, o_ref):
    pooled = jnp.mean(x_ref[0], axis=0, keepdims=True)            # [1, C]
    o_ref[0] = jnp.dot(pooled.astype(jnp.bfloat16), w_ref[...],
                       preferred_element_type=jnp.float32) + b_ref[...]


@jax.jit
def global_pool_fc(x, w, b):
    """Fused global average pool + classifier Linear.  x:[N,P,C] -> [N,NC]."""
    N, P, C = x.shape
    NC = w.shape[1]
    out = pl.pallas_call(
        _pool_fc_kernel,
        out_shape=jax.ShapeDtypeStruct((N, 1, NC), jnp.float32),
        grid=(N,),
        in_specs=[
            pl.BlockSpec((1, P, C), lambda n: (n, 0, 0)),
            pl.BlockSpec((C, NC), lambda n: (0, 0)),
            pl.BlockSpec((1, NC), lambda n: (0, 0)),
        ],
        out_specs=pl.BlockSpec((1, 1, NC), lambda n: (n, 0, 0)),
        compiler_params=pltpu.CompilerParams(
            dimension_semantics=("parallel",)),
    )(x, w, b.reshape(1, NC))
    return out[:, 0, :]


# --------------------------- layout-only glue ----------------------------------

def pointwise_conv_bn_act(x, w, scale, bias, act):
    N, H, W, C = x.shape
    y = matmul_affine_act(x.reshape(N * H * W, C), w, scale, bias, act=act)
    return y.reshape(N, H, W, -1)


def stem_conv_bn_silu(x, w, scale, bias):
    """3x3 stride-2 conv via im2col (only 3 input channels -> negligible cost)."""
    k, stride = 3, 2
    N, H, W, C = x.shape
    p = k // 2
    xp = jnp.pad(x, ((0, 0), (p, p), (p, p), (0, 0)))
    Ho = (H + 2 * p - k) // stride + 1
    Wo = (W + 2 * p - k) // stride + 1
    taps = []
    for dy in range(k):
        for dx in range(k):
            taps.append(xp[:, dy:dy + (Ho - 1) * stride + 1:stride,
                              dx:dx + (Wo - 1) * stride + 1:stride, :])
    patches = jnp.stack(taps, axis=3).reshape(N * Ho * Wo, k * k * C)
    y = matmul_affine_act(patches, w, scale, bias, act="silu")
    return y.reshape(N, Ho, Wo, -1)


# --------------------------- parameters ----------------------------------------

class ParamGen:
    """Deterministic random params, zero-padded so padded lanes stay inert."""

    def __init__(self, seed):
        self._key = jax.random.PRNGKey(seed)

    def _next(self):
        self._key, sub = jax.random.split(self._key)
        return sub

    def matrix(self, rows, cols, rows_pad=None, cols_pad=None):
        w = jax.random.normal(self._next(), (rows, cols), jnp.float32)
        w = w / math.sqrt(rows)
        rp = rows_pad if rows_pad is not None else rows
        cp = cols_pad if cols_pad is not None else cols
        return jnp.pad(w, ((0, rp - rows), (0, cp - cols))).astype(jnp.bfloat16)

    def dw(self, k, c, c_pad=None):
        cp = c_pad if c_pad is not None else c
        w = jax.random.normal(self._next(), (k * k, c), jnp.float32) / k
        return jnp.pad(w, ((0, 0), (0, cp - c)))

    def bn(self, c, c_pad=None):
        cp = c_pad if c_pad is not None else c
        scale = 1.0 + 0.05 * jax.random.normal(self._next(), (c,), jnp.float32)
        bias = 0.05 * jax.random.normal(self._next(), (c,), jnp.float32)
        return jnp.pad(scale, (0, cp - c)), jnp.pad(bias, (0, cp - c))

    def bias(self, c, c_pad=None):
        cp = c_pad if c_pad is not None else c
        b = 0.05 * jax.random.normal(self._next(), (c,), jnp.float32)
        return jnp.pad(b, (0, cp - c))


# EfficientNet-B0 stage config: (expand_ratio, kernel, stride, out_ch, repeats)
_B0_CFG = [
    (1, 3, 1, 16, 1),
    (6, 3, 2, 24, 2),
    (6, 5, 2, 40, 2),
    (6, 3, 2, 80, 3),
    (6, 5, 1, 112, 3),
    (6, 5, 2, 192, 4),
    (6, 3, 1, 320, 1),
]


def make_params(seed, num_classes):
    pg = ParamGen(seed)
    params = {}

    c_stem, c_stem_p = 32, _round_up(32, LANE)
    params["stem_w"] = pg.matrix(27, c_stem, cols_pad=c_stem_p)
    params["stem_scale"], params["stem_bias"] = pg.bn(c_stem, c_stem_p)

    blocks = []
    in_c, in_cp = c_stem, c_stem_p
    for (e, k, s, out_c, reps) in _B0_CFG:
        for bi in range(reps):
            stride = s if bi == 0 else 1
            mid_c = in_c * e
            mid_cp = _round_up(mid_c, LANE)
            out_cp = _round_up(out_c, LANE)
            rd = max(1, in_c // 4)
            rd_p = _round_up(rd, LANE)
            blk = {"expand": e, "k": k, "stride": stride,
                   "residual": (stride == 1 and in_c == out_c)}
            if e != 1:
                blk["exp_w"] = pg.matrix(in_c, mid_c, rows_pad=in_cp, cols_pad=mid_cp)
                blk["exp_scale"], blk["exp_bias"] = pg.bn(mid_c, mid_cp)
            blk["dw_w"] = pg.dw(k, mid_c, mid_cp)
            blk["dw_scale"], blk["dw_bias"] = pg.bn(mid_c, mid_cp)
            blk["se_w1"] = pg.matrix(mid_c, rd, rows_pad=mid_cp, cols_pad=rd_p)
            blk["se_b1"] = pg.bias(rd, rd_p)
            blk["se_w2"] = pg.matrix(rd, mid_c, rows_pad=rd_p, cols_pad=mid_cp)
            blk["se_b2"] = pg.bias(mid_c, mid_cp)
            blk["proj_w"] = pg.matrix(mid_c, out_c, rows_pad=mid_cp, cols_pad=out_cp)
            blk["proj_scale"], blk["proj_bias"] = pg.bn(out_c, out_cp)
            blocks.append(blk)
            in_c, in_cp = out_c, out_cp
    params["blocks"] = blocks

    params["head_w"] = pg.matrix(in_c, 1280, rows_pad=in_cp)
    params["head_scale"], params["head_bias"] = pg.bn(1280)
    nc_p = _round_up(num_classes, LANE)
    params["cls_w"] = pg.matrix(1280, num_classes, cols_pad=nc_p)
    params["cls_b"] = pg.bias(num_classes, nc_p)
    params["num_classes"] = num_classes
    return params


# --------------------------- forward --------------------------------------------

def vegetable_model_forward(params, x_nchw):
    x = jnp.transpose(x_nchw, (0, 2, 3, 1)).astype(jnp.float32)   # NCHW -> NHWC

    # stem: 3x3 stride-2 conv + BN + SiLU
    x = stem_conv_bn_silu(x, params["stem_w"],
                          params["stem_scale"], params["stem_bias"])

    # MBConv blocks
    for blk in params["blocks"]:
        shortcut = x
        h = x
        if blk["expand"] != 1:
            h = pointwise_conv_bn_act(h, blk["exp_w"], blk["exp_scale"],
                                      blk["exp_bias"], "silu")
        h = dwconv_bn_silu(h, blk["dw_w"], blk["dw_scale"], blk["dw_bias"],
                           k=blk["k"], stride=blk["stride"])
        N, Ho, Wo, Cm = h.shape
        h2 = h.reshape(N, Ho * Wo, Cm)
        gate = se_gate(h2, blk["se_w1"], blk["se_b1"],
                       blk["se_w2"], blk["se_b2"])
        sc = shortcut.reshape(N, Ho * Wo, -1) if blk["residual"] else None
        y = gate_proj_bn(h2, gate, blk["proj_w"], blk["proj_scale"],
                         blk["proj_bias"], sc)
        x = y.reshape(N, Ho, Wo, -1)

    # head: 1x1 conv to 1280 + BN + SiLU
    x = pointwise_conv_bn_act(x, params["head_w"], params["head_scale"],
                              params["head_bias"], "silu")
    N, H, W, C = x.shape

    # global average pool + Flatten (no-op on [N,1280]) + Linear, fused
    logits_pad = global_pool_fc(x.reshape(N, H * W, C),
                                params["cls_w"], params["cls_b"])
    return logits_pad[:, :params["num_classes"]]


if __name__ == "__main__":
    num_classes = 15
    params = make_params(seed=0, num_classes=num_classes)

    key = jax.random.PRNGKey(0)
    x = jax.random.normal(key, (2, 3, 32, 32), jnp.float32)       # NCHW like PyTorch

    out = vegetable_model_forward(params, x)
    out = jax.block_until_ready(out)

    assert out.shape == (2, num_classes), out.shape
    assert out.dtype == jnp.float32
    print("KERNEL_OK")
</pallas_src>

<mosaic_0001>
module attributes {stable_mosaic.version = 11 : i64} {
  func.func @_matmul_affine_act_kernel(%arg0: i32, %arg1: memref<256x27xf32, #tpu.memory_space<vmem>>, %arg2: memref<27x128xbf16, #tpu.memory_space<vmem>>, %arg3: memref<1x128xf32, #tpu.memory_space<vmem>>, %arg4: memref<1x128xf32, #tpu.memory_space<vmem>>, %arg5: memref<256x128xf32, #tpu.memory_space<vmem>>) attributes {dimension_semantics = [#tpu.dimension_semantics<parallel>], iteration_bounds = array<i64: 2>, scalar_prefetch = 0 : i64, scratch_operands = 0 : i64, tpu.core_type = #tpu.core_type<tc>, window_params = [{transform_indices = @transform_0, window_bounds = array<i64: 256, 27>}, {pipeline_mode = #tpu.pipeline_mode<synchronous>, transform_indices = @transform_1, window_bounds = array<i64: 27, 128>}, {pipeline_mode = #tpu.pipeline_mode<synchronous>, transform_indices = @transform_2, window_bounds = array<i64: 1, 128>}, {pipeline_mode = #tpu.pipeline_mode<synchronous>, transform_indices = @transform_3, window_bounds = array<i64: 1, 128>}, {transform_indices = @transform_4, window_bounds = array<i64: 256, 128>}]} {
    %c0 = arith.constant 0 : index
    %c0_0 = arith.constant 0 : index
    %0 = vector.load %arg1[%c0, %c0_0] : memref<256x27xf32, #tpu.memory_space<vmem>>, vector<256x27xf32>
    %1 = arith.truncf %0 : vector<256x27xf32> to vector<256x27xbf16>
    %c0_1 = arith.constant 0 : index
    %c0_2 = arith.constant 0 : index
    %2 = vector.load %arg2[%c0_1, %c0_2] : memref<27x128xbf16, #tpu.memory_space<vmem>>, vector<27x128xbf16>
    %cst = arith.constant dense<0.000000e+00> : vector<256x128xf32>
    %3 = tpu.matmul %1, %2, %cst {dimension_numbers = #tpu.dot_dimension_numbers<[1], [0], [0], [1], [0, 0, 1, 1], [], []>} : vector<256x27xbf16>, vector<27x128xbf16>, vector<256x128xf32> -> vector<256x128xf32>
    %c0_3 = arith.constant 0 : index
    %c0_4 = arith.constant 0 : index
    %4 = vector.load %arg3[%c0_3, %c0_4] : memref<1x128xf32, #tpu.memory_space<vmem>>, vector<1x128xf32>
    %5 = vector.broadcast %4 : vector<1x128xf32> to vector<256x128xf32>
    %6 = arith.mulf %3, %5 : vector<256x128xf32>
    %c0_5 = arith.constant 0 : index
    %c0_6 = arith.constant 0 : index
    %7 = vector.load %arg4[%c0_5, %c0_6] : memref<1x128xf32, #tpu.memory_space<vmem>>, vector<1x128xf32>
    %8 = vector.broadcast %7 : vector<1x128xf32> to vector<256x128xf32>
    %9 = arith.addf %6, %8 : vector<256x128xf32>
    %cst_7 = arith.constant 0.000000e+00 : f32
    %10 = vector.broadcast %cst_7 : f32 to vector<256x128xf32>
    %11 = arith.subf %10, %9 : vector<256x128xf32>
    %12 = math.exp %11 : vector<256x128xf32>
    %cst_8 = arith.constant 1.000000e+00 : f32
    %13 = vector.broadcast %cst_8 : f32 to vector<256x128xf32>
    %14 = arith.addf %13, %12 : vector<256x128xf32>
    %15 = tpu.reciprocal %14 {approx = true} : vector<256x128xf32> -> vector<256x128xf32>
    %16 = arith.mulf %9, %15 : vector<256x128xf32>
    %c0_9 = arith.constant 0 : index
    %c0_10 = arith.constant 0 : index
    %17 = vector.load %arg5[%c0_9, %c0_10] : memref<256x128xf32, #tpu.memory_space<vmem>>, vector<256x128xf32>
    tpu.vector_store %arg5[%c0_9, %c0_10], %16 {strides = array<i32>} : memref<256x128xf32, #tpu.memory_space<vmem>>, vector<256x128xf32>,
    return
  }
  func.func @transform_0(%arg0: i32) -> (i32, i32) {
    %c0_i32 = arith.constant 0 : i32
    %c0_i32_0 = arith.constant 0 : i32
    return %arg0, %c0_i32 : i32, i32
  }
  func.func @transform_1(%arg0: i32) -> (i32, i32) {
    %c0_i32 = arith.constant 0 : i32
    %c0_i32_0 = arith.constant 0 : i32
    %c0_i32_1 = arith.constant 0 : i32
    return %c0_i32, %c0_i32_0 : i32, i32
  }
  func.func @transform_2(%arg0: i32) -> (i32, i32) {
    %c0_i32 = arith.constant 0 : i32
    %c0_i32_0 = arith.constant 0 : i32
    %c0_i32_1 = arith.constant 0 : i32
    return %c0_i32, %c0_i32_0 : i32, i32
  }
  func.func @transform_3(%arg0: i32) -> (i32, i32) {
    %c0_i32 = arith.constant 0 : i32
    %c0_i32_0 = arith.constant 0 : i32
    %c0_i32_1 = arith.constant 0 : i32
    return %c0_i32, %c0_i32_0 : i32, i32
  }
  func.func @transform_4(%arg0: i32) -> (i32, i32) {
    %c0_i32 = arith.constant 0 : i32
    %c0_i32_0 = arith.constant 0 : i32
    return %arg0, %c0_i32 : i32, i32
  }
}

</mosaic_0001>

<llo_original>
// kernel: matmul_affine_act.1
$region0: #{matmul_affine_act.1}
  #allocation0 [shape = 'u32[]', space=smem, size = 0x4, offset = 0x4, fixed_abs, tag = 'smem constant byte address 0x4 - core index']
  #allocation1 [shape = 'u32[144,128]{1,0:T(1,128)}', space=vmem, size = 0x12000, scoped, tag = 'internal scratch']
  %s0 = inlined_call_operand.vmem [shape: f32[512,27], index: 0, kind: input, shape index: {}]
  %s1 = inlined_call_operand.vmem [shape: bf16[27,128], index: 1, kind: input, shape index: {}]
  %s2 = inlined_call_operand.vmem [shape: f32[1,128], index: 2, kind: input, shape index: {}]
  %s3 = inlined_call_operand.vmem [shape: f32[1,128], index: 3, kind: input, shape index: {}]
  %s4 = inlined_call_operand.hbm [shape: f32[512,128], index: 4, kind: output, shape index: {}]
  %s5 = sld [smem:[#allocation0]]
  $region49: #{matmul_affine_act.1} parent=0
    _
  %s7 = ssub.s32 1, %s5
  %s8 = scalar_select 0, %s7, %s5
  $region1: #{matmul_affine_act.1} parent=0
    #allocation2 [shape = 'u8[262144]{0}', space=vmem, size = 0x40000, scoped, tag = 'output window, operand 0']
    #allocation3 [shape = 's32[2]{0}', space=sflag, size = 0x8, scoped, tag = 'scoped memory for matmul_affine_act.1']
    %9 = vsyncpa [#allocation3], 0
    %s10 = scalar_lea.sflag [#allocation3], 1
    %11 = vsyncpa %s10, 0
    loop: start=0, step=1, limit=4
    $region2: #{matmul_affine_act.1} parent=1 // loop_pre_header
      _
    $region3: #{matmul_affine_act.1} parent=1 // loop_header
      %s13 = sphi 0, %s17
      %p14 = scmp.ge.s32.totalorder %s13, 4
      %s23 = sphi 0, %s25
      %s26 = sphi 0, %s23
      %s27 = sphi 0, %s26
      %s43 = sphi 0, %s27
      %s47 = sphi 0, %s47
      %s49 = sphi 0, %s47
      %s50 = sphi 0, %s49
      %s64 = sphi 0, %s50
      %s68 = sphi 0, %s68
      %s70 = sphi 0, %s68
      %s71 = sphi 0, %s70
      %s85 = sphi 0, %s71
      %s89 = sphi 0, %s89
      %s91 = sphi 0, %s89
      %s92 = sphi 0, %s91
      %s106 = sphi 0, %s92
      %s112 = sphi 0, %s114
      %s115 = sphi 0, %s112
      %s116 = sphi 0, %s115
      %s132 = sphi 0, %s116
    $region4: #{matmul_affine_act.1} parent=1 // loop_header_branch
      %16 = sbr.rel (%p14) target = $region8
    $region5: #{matmul_affine_act.1} parent=1 // loop_body
      %s18 = ssub.s32 %s13, 1
      %s19 = ssub.s32 %s13, 2
      %s20 = sadd.s32 %s13, 1
      %s21 = ssub.s32 %s13, %s20
      %p22 = scmp.eq.s32.totalorder %s21, 0
      %s24 = sadd.s32 %s23, 1
      %s25 = scalar_select %p22, %s23, %s24
      %p28 = pneg %p22
      %p29 = scmp.eq.s32.totalorder %s13, 1
      %p30 = por %p28, %p29
      %p31 = scmp.ne.s32.totalorder %s23, %s26
      %p32 = scmp.eq.s32.totalorder %s13, 0
      %p33 = por %p31, %p32
      %p34 = scmp.ne.s32.totalorder %s23, %s26
      %p35 = scmp.eq.s32.totalorder %s18, 1
      %p36 = por %p34, %p35
      %p37 = scmp.ne.s32.totalorder %s26, %s27
      %p38 = scmp.eq.s32.totalorder %s18, 0
      %p39 = por %p37, %p38
      %p40 = scmp.ne.s32.totalorder %s26, %s27
      %p41 = scmp.eq.s32.totalorder %s19, 1
      %p42 = por %p40, %p41
      %p44 = scmp.ne.s32.totalorder %s27, %s43
      %p45 = scmp.eq.s32.totalorder %s19, 0
      %p46 = por %p44, %p45
      %s48 = sadd.s32 %s47, 1
      %p51 = scmp.eq.s32.totalorder %s13, 1
      %p52 = scmp.ne.s32.totalorder %s47, %s49
      %p53 = scmp.eq.s32.totalorder %s13, 0
      %p54 = por %p52, %p53
      %p55 = scmp.ne.s32.totalorder %s47, %s49
      %p56 = scmp.eq.s32.totalorder %s18, 1
      %p57 = por %p55, %p56
      %p58 = scmp.ne.s32.totalorder %s49, %s50
      %p59 = scmp.eq.s32.totalorder %s18, 0
      %p60 = por %p58, %p59
      %p61 = scmp.ne.s32.totalorder %s49, %s50
      %p62 = scmp.eq.s32.totalorder %s19, 1
      %p63 = por %p61, %p62
      %p65 = scmp.ne.s32.totalorder %s50, %s64
      %p66 = scmp.eq.s32.totalorder %s19, 0
      %p67 = por %p65, %p66
      %s69 = sadd.s32 %s68, 1
      %p72 = scmp.eq.s32.totalorder %s13, 1
      %p73 = scmp.ne.s32.totalorder %s68, %s70
      %p74 = scmp.eq.s32.totalorder %s13, 0
      %p75 = por %p73, %p74
      %p76 = scmp.ne.s32.totalorder %s68, %s70
      %p77 = scmp.eq.s32.totalorder %s18, 1
      %p78 = por %p76, %p77
      %p79 = scmp.ne.s32.totalorder %s70, %s71
      %p80 = scmp.eq.s32.totalorder %s18, 0
      %p81 = por %p79, %p80
      %p82 = scmp.ne.s32.totalorder %s70, %s71
      %p83 = scmp.eq.s32.totalorder %s19, 1
      %p84 = por %p82, %p83
      %p86 = scmp.ne.s32.totalorder %s71, %s85
      %p87 = scmp.eq.s32.totalorder %s19, 0
      %p88 = por %p86, %p87
      %s90 = sadd.s32 %s89, 1
      %p93 = scmp.eq.s32.totalorder %s13, 1
      %p94 = scmp.ne.s32.totalorder %s89, %s91
      %p95 = scmp.eq.s32.totalorder %s13, 0
      %p96 = por %p94, %p95
      %p97 = scmp.ne.s32.totalorder %s89, %s91
      %p98 = scmp.eq.s32.totalorder %s18, 1
      %p99 = por %p97, %p98
      %p100 = scmp.ne.s32.totalorder %s91, %s92
      %p101 = scmp.eq.s32.totalorder %s18, 0
      %p102 = por %p100, %p101
      %p103 = scmp.ne.s32.totalorder %s91, %s92
      %p104 = scmp.eq.s32.totalorder %s19, 1
      %p105 = por %p103, %p104
      %p107 = scmp.ne.s32.totalorder %s92, %s106
      %p108 = scmp.eq.s32.totalorder %s19, 0
      %p109 = por %p107, %p108
      %s110 = ssub.s32 %s13, %s20
      %p111 = scmp.eq.s32.totalorder %s110, 0
      %s113 = sadd.s32 %s112, 1
      %s114 = scalar_select %p111, %s112, %s113
      %p117 = pneg %p111
      %p118 = scmp.eq.s32.totalorder %s13, 1
      %p119 = por %p117, %p118
      %p120 = scmp.ne.s32.totalorder %s112, %s115
      %p121 = scmp.eq.s32.totalorder %s13, 0
      %p122 = por %p120, %p121
      %p123 = scmp.ne.s32.totalorder %s112, %s115
      %p124 = scmp.eq.s32.totalorder %s18, 1
      %p125 = por %p123, %p124
      %p126 = scmp.ne.s32.totalorder %s115, %s116
      %p127 = scmp.eq.s32.totalorder %s18, 0
      %p128 = por %p126, %p127
      %p129 = scmp.ne.s32.totalorder %s115, %s116
      %p130 = scmp.eq.s32.totalorder %s19, 1
      %p131 = por %p129, %p130
      %p133 = scmp.ne.s32.totalorder %s116, %s132
      %p134 = scmp.eq.s32.totalorder %s19, 0
      %p135 = por %p133, %p134
      %p136 = scmp.le.s32.totalorder 1, %s13
      %p137 = scmp.lt.s32.totalorder %s13, 3
      %p138 = pnand %p136, %p137
      %p139 = pneg %p138
      // Predicated region
      $region9: #{matmul_affine_act.1} parent=5 // pred_check
        _
      $region10: #{matmul_affine_act.1} parent=5 // pred_check_branch
        %141 = sbr.rel (%p138) target = $region12
      $region11: #{matmul_affine_act.1} parent=5 // pred_region
        %s142 = ssub.s32 %s13, 1
        // Predicated region
        $region13: #{matmul_affine_act.1} parent=11 // pred_check
          %p143 = pneg %p60
        $region14: #{matmul_affine_act.1} parent=11 // pred_check_branch
          %145 = sbr.rel (%p143) target = $region16
        $region15: #{matmul_affine_act.1} parent=11 // pred_region
          _
        $region16: #{matmul_affine_act.1} parent=11 // pred_fallthru
          _
        // Predicated region
        $region17: #{matmul_affine_act.1} parent=11 // pred_check
          %p146 = pneg %p81
        $region18: #{matmul_affine_act.1} parent=11 // pred_check_branch
          %148 = sbr.rel (%p146) target = $region20
        $region19: #{matmul_affine_act.1} parent=11 // pred_region
          _
        $region20: #{matmul_affine_act.1} parent=11 // pred_fallthru
          _
        // Predicated region
        $region21: #{matmul_affine_act.1} parent=11 // pred_check
          %p149 = pneg %p102
        $region22: #{matmul_affine_act.1} parent=11 // pred_check_branch
          %151 = sbr.rel (%p149) target = $region24
        $region23: #{matmul_affine_act.1} parent=11 // pred_region
          _
        $region24: #{matmul_affine_act.1} parent=11 // pred_fallthru
          _
      $region12: #{matmul_affine_act.1} parent=5 // pred_fallthru
        _
      %p152 = scmp.lt.s32.totalorder %s13, 2
      // Predicated region
      $region25: #{matmul_affine_act.1} parent=5 // pred_check
        %p153 = pneg %p152
      $region26: #{matmul_affine_act.1} parent=5 // pred_check_branch
        %155 = sbr.rel (%p153) target = $region28
      $region27: #{matmul_affine_act.1} parent=5 // pred_region
        // Predicated region
        $region29: #{matmul_affine_act.1} parent=27 // pred_check
          %p156 = pneg %p33
        $region30: #{matmul_affine_act.1} parent=27 // pred_check_branch
          %158 = sbr.rel (%p156) target = $region32
        $region31: #{matmul_affine_act.1} parent=27 // pred_region
          %s159 = smul.u32 32, %s13
          %p160 = scmp.lt.s32.totalorder %s159, 63
          %s161 = scalar_select %p160, %s159, 63
          %s162 = smul.addr %s161, 8
          %s163 = scalar_lea.vmem %s0, %s162
          %s164 = smul.u32 32, %s13
        $region32: #{matmul_affine_act.1} parent=27 // pred_fallthru
          _
      $region28: #{matmul_affine_act.1} parent=5 // pred_fallthru
        _
      %p165 = scmp.le.s32.totalorder 1, %s13
      %p166 = scmp.lt.s32.totalorder %s13, 3
      %p167 = pnand %p165, %p166
      %p168 = pneg %p167
      // Predicated region
      $region33: #{matmul_affine_act.1} parent=5 // pred_check
        _
      $region34: #{matmul_affine_act.1} parent=5 // pred_check_branch
        %170 = sbr.rel (%p167) target = $region36
      $region35: #{matmul_affine_act.1} parent=5 // pred_region
        %s171 = ssub.s32 %s13, 1
        %s172 = smul.u32 32, %s18
        %p173 = scmp.lt.s32.totalorder %s172, 63
        %s174 = scalar_select %p173, %s172, 63
        %s175 = smul.addr %s174, 8
        %s176 = scalar_lea.vmem %s0, %s175
        %p177 = pneg %p39
        %p178 = pneg %p36
        %p179 = pneg %p60
        %p180 = pneg %p57
        %p181 = pneg %p81
        %p182 = pneg %p78
        %p183 = pneg %p102
        %p184 = pneg %p99
        %p185 = pneg %p128
        %p186 = pneg %p125
        %s187 = sand.u32 %s115, 1
        %s188 = scalar_lea.sflag [#allocation3], %s187
        %s189 = sand.u32 %s115, 1
        %s190 = smul.addr %s189, 256
        %s191 = scalar_lea.vmem [#allocation2], %s190
        %s192 = smul.u32 32, %s18
        %p193 = scmp.lt.s32.totalorder %s192, 63
        %s194 = scalar_select %p193, %s192, 63
        %s195 = smul.addr %s194, 8
        %s196 = scalar_lea.vmem %s0, %s195
        %s197 = smul.u32 32, %s18
        %s198 = smul.u32 32, %s18
        %v200 = vld [vmem:[%s196] sm:$0xff]
        %v201 = vld [vmem:[%s196 + $0x8] sm:$0xff]
        %v202 = vld [vmem:[%s196 + $0x10] sm:$0xff]
        %v203 = vld [vmem:[%s196 + $0x18] sm:$0xff]
        %v204 = vld [vmem:[%s196 + $0x20] sm:$0xff]
        %v205 = vld [vmem:[%s196 + $0x28] sm:$0xff]
        %v206 = vld [vmem:[%s196 + $0x30] sm:$0xff]
        %v207 = vld [vmem:[%s196 + $0x38] sm:$0xff]
        %v208 = vld [vmem:[%s196 + $0x40] sm:$0xff]
        %v209 = vld [vmem:[%s196 + $0x48] sm:$0xff]
        %v210 = vld [vmem:[%s196 + $0x50] sm:$0xff]
        %v211 = vld [vmem:[%s196 + $0x58] sm:$0xff]
        %v212 = vld [vmem:[%s196 + $0x60] sm:$0xff]
        %v213 = vld [vmem:[%s196 + $0x68] sm:$0xff]
        %v214 = vld [vmem:[%s196 + $0x70] sm:$0xff]
        %v215 = vld [vmem:[%s196 + $0x78] sm:$0xff]
        %v216 = vld [vmem:[%s196 + $0x80] sm:$0xff]
        %v217 = vld [vmem:[%s196 + $0x88] sm:$0xff]
        %v218 = vld [vmem:[%s196 + $0x90] sm:$0xff]
        %v219 = vld [vmem:[%s196 + $0x98] sm:$0xff]
        %v220 = vld [vmem:[%s196 + $0xa0] sm:$0xff]
        %v221 = vld [vmem:[%s196 + $0xa8] sm:$0xff]
        %v222 = vld [vmem:[%s196 + $0xb0] sm:$0xff]
        %v223 = vld [vmem:[%s196 + $0xb8] sm:$0xff]
        %v224 = vld [vmem:[%s196 + $0xc0] sm:$0xff]
        %v225 = vld [vmem:[%s196 + $0xc8] sm:$0xff]
        %v226 = vld [vmem:[%s196 + $0xd0] sm:$0xff]
        %v227 = vld [vmem:[%s196 + $0xd8] sm:$0xff]
        %v228 = vld [vmem:[%s196 + $0xe0] sm:$0xff]
        %v229 = vld [vmem:[%s196 + $0xe8] sm:$0xff]
        %v230 = vld [vmem:[%s196 + $0xf0] sm:$0xff]
        %v231 = vld [vmem:[%s196 + $0xf8] sm:$0xff]
        %v232 = vpack.c.bf16 %v201, %v200
        %v233 = vpack.c.bf16 %v203, %v202
        %v234 = vpack.c.bf16 %v205, %v204
        %v235 = vpack.c.bf16 %v207, %v206
        %v236 = vpack.c.bf16 %v209, %v208
        %v237 = vpack.c.bf16 %v211, %v210
        %v238 = vpack.c.bf16 %v213, %v212
        %v239 = vpack.c.bf16 %v215, %v214
        %v240 = vpack.c.bf16 %v217, %v216
        %v241 = vpack.c.bf16 %v219, %v218
        %v242 = vpack.c.bf16 %v221, %v220
        %v243 = vpack.c.bf16 %v223, %v222
        %v244 = vpack.c.bf16 %v225, %v224
        %v245 = vpack.c.bf16 %v227, %v226
        %v246 = vpack.c.bf16 %v229, %v228
        %v247 = vpack.c.bf16 %v231, %v230
        %v248 = vld [vmem:[%s1] sm:$0xf]
        %v249 = vld [vmem:[%s1 + $0x4] sm:$0xf]
        %v250 = vld [vmem:[%s1 + $0x8] sm:$0xf]
        %v251 = vld [vmem:[%s1 + $0xc] sm:$0x3]
        %v256 = vunpack.c.l.b16 %v248
        %v257 = vunpack.c.l.b16 %v249
        %v258 = vunpack.c.l.b16 %v250
        %v259 = vunpack.c.l.b16 %v251
        %v260 = vpack.c.b16 %v257, %v256
        %v261 = vpack.c.b16 %v259, %v258
        %vm263 = vcmask 220160
        %v265 = vsel %vm263, %v232, 0
        %v268 = vsel %vm263, %v233, 0
        %v271 = vsel %vm263, %v234, 0
        %v274 = vsel %vm263, %v235, 0
        %v277 = vsel %vm263, %v236, 0
        %v280 = vsel %vm263, %v237, 0
        %v283 = vsel %vm263, %v238, 0
        %v286 = vsel %vm263, %v239, 0
        %v289 = vsel %vm263, %v240, 0
        %v292 = vsel %vm263, %v241, 0
        %v295 = vsel %vm263, %v242, 0
        %v298 = vsel %vm263, %v243, 0
        %v301 = vsel %vm263, %v244, 0
        %v304 = vsel %vm263, %v245, 0
        %v307 = vsel %vm263, %v246, 0
        %v310 = vsel %vm263, %v247, 0
        %vm312 = vcmask 1044480
        %vm313 = vcmask 1045504
        %v314 = vsel %vm312, 4294967295, 65535
        %v315 = vsel %vm313, %v314, 0
        %v317 = vand.u32 %v261, %v315
        %319 = vmatprep.subr.bf16.mxu0 0
        %320 = vmatpush1.bf16.msra.mxu0 %v260
        %321 = vmatprep.subr.bf16.mxu0 0
        %322 = vmatpush1.bf16.msra.mxu0 %v317
        %323 = vmatprep.subr.bf16.mxu0 0
        %324 = vmatpush1.bf16.msra.mxu0 0
        %325 = vmatprep.subr.bf16.mxu0 0
        %326 = vmatpush1.bf16.msra.mxu0 0
        %327 = vmatprep.subr.bf16.mxu0 0
        %328 = vmatpush1.bf16.msra.mxu0 0
        %329 = vmatprep.subr.bf16.mxu0 0
        %330 = vmatpush1.bf16.msra.mxu0 0
        %331 = vmatprep.subr.bf16.mxu0 0
        %332 = vmatpush1.bf16.msra.mxu0 0
        %333 = vmatprep.subr.bf16.mxu0 0
        %334 = vmatpush1.bf16.msra.mxu0 0
        %335 = vmatprep.subr.bf16.mxu0 0
        %336 = vmatpush1.bf16.msra.mxu0 0
        %337 = vmatprep.subr.bf16.mxu0 0
        %338 = vmatpush1.bf16.msra.mxu0 0
        %339 = vmatprep.subr.bf16.mxu0 0
        %340 = vmatpush1.bf16.msra.mxu0 0
        %341 = vmatprep.subr.bf16.mxu0 0
        %342 = vmatpush1.bf16.msra.mxu0 0
        %343 = vmatprep.subr.bf16.mxu0 0
        %344 = vmatpush1.bf16.msra.mxu0 0
        %345 = vmatprep.subr.bf16.mxu0 0
        %346 = vmatpush1.bf16.msra.mxu0 0
        %347 = vmatprep.subr.bf16.mxu0 0
        %348 = vmatpush1.bf16.msra.mxu0 0
        %349 = vmatprep.subr.bf16.mxu0 0
        %350 = vmatpush1.bf16.msra.mxu0 0
        %351 = vmatprep.mubr.bf16.mxu0 0
        %352 = vmatmul.mubr.bf16.gmra.mrb[0].mxu0 %v265
        %v353 = vpop.f32.mrb[0].mxu0
        %v354 = vadd.f32 0.0, %v353
        %v355 = vpop.f32.mrb[0].mxu0
        %v356 = vpop.f32.mrb[0].mxu0
        %v357 = vadd.f32 0.0, %v356
        %v358 = vpop.f32.mrb[0].mxu0
        %359 = vmatprep.mubr.bf16.mxu0 0
        %360 = vmatmul.mubr.bf16.gmra.mrb[0].mxu0 %v268
        %v361 = vpop.f32.mrb[0].mxu0
        %v362 = vadd.f32 0.0, %v361
        %v363 = vpop.f32.mrb[0].mxu0
        %v364 = vpop.f32.mrb[0].mxu0
        %v365 = vadd.f32 0.0, %v364
        %v366 = vpop.f32.mrb[0].mxu0
        %367 = vmatprep.mubr.bf16.mxu0 0
        %368 = vmatmul.mubr.bf16.gmra.mrb[0].mxu0 %v271
        %v369 = vpop.f32.mrb[0].mxu0
        %v370 = vadd.f32 0.0, %v369
        %v371 = vpop.f32.mrb[0].mxu0
        %v372 = vpop.f32.mrb[0].mxu0
        %v373 = vadd.f32 0.0, %v372
        %v374 = vpop.f32.mrb[0].mxu0
        %375 = vmatprep.mubr.bf16.mxu0 0
        %376 = vmatmul.mubr.bf16.gmra.mrb[0].mxu0 %v274
        %v377 = vpop.f32.mrb[0].mxu0
        %v378 = vadd.f32 0.0, %v377
        %v379 = vpop.f32.mrb[0].mxu0
        %v380 = vpop.f32.mrb[0].mxu0
        %v381 = vadd.f32 0.0, %v380
        %v382 = vpop.f32.mrb[0].mxu0
        %383 = vmatprep.mubr.bf16.mxu0 0
        %384 = vmatmul.mubr.bf16.gmra.mrb[0].mxu0 %v277
        %v385 = vpop.f32.mrb[0].mxu0
        %v386 = vadd.f32 0.0, %v385
        %v387 = vpop.f32.mrb[0].mxu0
        %v388 = vpop.f32.mrb[0].mxu0
        %v389 = vadd.f32 0.0, %v388
        %v390 = vpop.f32.mrb[0].mxu0
        %391 = vmatprep.mubr.bf16.mxu0 0
        %392 = vmatmul.mubr.bf16.gmra.mrb[0].mxu0 %v280
        %v393 = vpop.f32.mrb[0].mxu0
        %v394 = vadd.f32 0.0, %v393
        %v395 = vpop.f32.mrb[0].mxu0
        %v396 = vpop.f32.mrb[0].mxu0
        %v397 = vadd.f32 0.0, %v396
        %v398 = vpop.f32.mrb[0].mxu0
        %399 = vmatprep.mubr.bf16.mxu0 0
        %400 = vmatmul.mubr.bf16.gmra.mrb[0].mxu0 %v283
        %v401 = vpop.f32.mrb[0].mxu0
        %v402 = vadd.f32 0.0, %v401
        %v403 = vpop.f32.mrb[0].mxu0
        %v404 = vpop.f32.mrb[0].mxu0
        %v405 = vadd.f32 0.0, %v404
        %v406 = vpop.f32.mrb[0].mxu0
        %407 = vmatprep.mubr.bf16.mxu0 0
        %408 = vmatmul.mubr.bf16.gmra.mrb[0].mxu0 %v286
        %v409 = vpop.f32.mrb[0].mxu0
        %v410 = vadd.f32 0.0, %v409
        %v411 = vpop.f32.mrb[0].mxu0
        %v412 = vpop.f32.mrb[0].mxu0
        %v413 = vadd.f32 0.0, %v412
        %v414 = vpop.f32.mrb[0].mxu0
        %415 = vmatprep.mubr.bf16.mxu0 0
        %416 = vmatmul.mubr.bf16.gmra.mrb[0].mxu0 %v289
        %v417 = vpop.f32.mrb[0].mxu0
        %v418 = vadd.f32 0.0, %v417
        %v419 = vpop.f32.mrb[0].mxu0
        %v420 = vpop.f32.mrb[0].mxu0
        %v421 = vadd.f32 0.0, %v420
        %v422 = vpop.f32.mrb[0].mxu0
        %423 = vmatprep.mubr.bf16.mxu0 0
        %424 = vmatmul.mubr.bf16.gmra.mrb[0].mxu0 %v292
        %v425 = vpop.f32.mrb[0].mxu0
        %v426 = vadd.f32 0.0, %v425
        %v427 = vpop.f32.mrb[0].mxu0
        %v428 = vpop.f32.mrb[0].mxu0
        %v429 = vadd.f32 0.0, %v428
        %v430 = vpop.f32.mrb[0].mxu0
        %431 = vmatprep.mubr.bf16.mxu0 0
        %432 = vmatmul.mubr.bf16.gmra.mrb[0].mxu0 %v295
        %v433 = vpop.f32.mrb[0].mxu0
        %v434 = vadd.f32 0.0, %v433
        %v435 = vpop.f32.mrb[0].mxu0
        %v436 = vpop.f32.mrb[0].mxu0
        %v437 = vadd.f32 0.0, %v436
        %v438 = vpop.f32.mrb[0].mxu0
        %439 = vmatprep.mubr.bf16.mxu0 0
        %440 = vmatmul.mubr.bf16.gmra.mrb[0].mxu0 %v298
        %v441 = vpop.f32.mrb[0].mxu0
        %v442 = vadd.f32 0.0, %v441
        %v443 = vpop.f32.mrb[0].mxu0
        %v444 = vpop.f32.mrb[0].mxu0
        %v445 = vadd.f32 0.0, %v444
        %v446 = vpop.f32.mrb[0].mxu0
        %447 = vmatprep.mubr.bf16.mxu0 0
        %448 = vmatmul.mubr.bf16.gmra.mrb[0].mxu0 %v301
        %v449 = vpop.f32.mrb[0].mxu0
        %v450 = vadd.f32 0.0, %v449
        %v451 = vpop.f32.mrb[0].mxu0
        %v452 = vpop.f32.mrb[0].mxu0
        %v453 = vadd.f32 0.0, %v452
        %v454 = vpop.f32.mrb[0].mxu0
        %455 = vmatprep.mubr.bf16.mxu0 0
        %456 = vmatmul.mubr.bf16.gmra.mrb[0].mxu0 %v304
        %v457 = vpop.f32.mrb[0].mxu0
        %v458 = vadd.f32 0.0, %v457
        %v459 = vpop.f32.mrb[0].mxu0
        %v460 = vpop.f32.mrb[0].mxu0
        %v461 = vadd.f32 0.0, %v460
        %v462 = vpop.f32.mrb[0].mxu0
        %463 = vmatprep.mubr.bf16.mxu0 0
        %464 = vmatmul.mubr.bf16.gmra.mrb[0].mxu0 %v307
        %v465 = vpop.f32.mrb[0].mxu0
        %v466 = vadd.f32 0.0, %v465
        %v467 = vpop.f32.mrb[0].mxu0
        %v468 = vpop.f32.mrb[0].mxu0
        %v469 = vadd.f32 0.0, %v468
        %v470 = vpop.f32.mrb[0].mxu0
        %471 = vmatprep.mubr.bf16.mxu0 0
        %472 = vmatmul.mubr.bf16.gmra.mrb[0].mxu0 %v310
        %v473 = vpop.f32.mrb[0].mxu0
        %v474 = vadd.f32 0.0, %v473
        %v475 = vpop.f32.mrb[0].mxu0
        %v476 = vpop.f32.mrb[0].mxu0
        %v477 = vadd.f32 0.0, %v476
        %v478 = vpop.f32.mrb[0].mxu0
        %479 = vdwg.mxu0
        %v480 = vld [vmem:[%s2] sm:$0x1]
        %v482 = vlaneseq
        %v483 = vshrl.u32 %v482, 7
        %v484 = vsub.s32 0, %v483
        %v485 = vrot.slane %v480, %v484
        %v487 = vmul.f32 %v354, %v485
        %v488 = vmul.f32 %v357, %v485
        %v489 = vmul.f32 %v362, %v485
        %v490 = vmul.f32 %v365, %v485
        %v491 = vmul.f32 %v370, %v485
        %v492 = vmul.f32 %v373, %v485
        %v493 = vmul.f32 %v378, %v485
        %v494 = vmul.f32 %v381, %v485
        %v495 = vmul.f32 %v386, %v485
        %v496 = vmul.f32 %v389, %v485
        %v497 = vmul.f32 %v394, %v485
        %v498 = vmul.f32 %v397, %v485
        %v499 = vmul.f32 %v402, %v485
        %v500 = vmul.f32 %v405, %v485
        %v501 = vmul.f32 %v410, %v485
        %v502 = vmul.f32 %v413, %v485
        %v503 = vmul.f32 %v418, %v485
        %v504 = vmul.f32 %v421, %v485
        %v505 = vmul.f32 %v426, %v485
        %v506 = vmul.f32 %v429, %v485
        %v507 = vmul.f32 %v434, %v485
        %v508 = vmul.f32 %v437, %v485
        %v509 = vmul.f32 %v442, %v485
        %v510 = vmul.f32 %v445, %v485
        %v511 = vmul.f32 %v450, %v485
        %v512 = vmul.f32 %v453, %v485
        %v513 = vmul.f32 %v458, %v485
        %v514 = vmul.f32 %v461, %v485
        %v515 = vmul.f32 %v466, %v485
        %v516 = vmul.f32 %v469, %v485
        %v517 = vmul.f32 %v474, %v485
        %v518 = vmul.f32 %v477, %v485
        %v519 = vld [vmem:[%s3] sm:$0x1]
        %v521 = vlaneseq
        %v522 = vshrl.u32 %v521, 7
        %v523 = vsub.s32 0, %v522
        %v524 = vrot.slane %v519, %v523
        %v526 = vadd.f32 %v487, %v524
        %v527 = vadd.f32 %v488, %v524
        %v528 = vadd.f32 %v489, %v524
        %v529 = vadd.f32 %v490, %v524
        %v530 = vadd.f32 %v491, %v524
        %v531 = vadd.f32 %v492, %v524
        %v532 = vadd.f32 %v493, %v524
        %v533 = vadd.f32 %v494, %v524
        %v534 = vadd.f32 %v495, %v524
        %v535 = vadd.f32 %v496, %v524
        %v536 = vadd.f32 %v497, %v524
        %v537 = vadd.f32 %v498, %v524
        %v538 = vadd.f32 %v499, %v524
        %v539 = vadd.f32 %v500, %v524
        %v540 = vadd.f32 %v501, %v524
        %v541 = vadd.f32 %v502, %v524
        %v542 = vadd.f32 %v503, %v524
        %v543 = vadd.f32 %v504, %v524
        %v544 = vadd.f32 %v505, %v524
        %v545 = vadd.f32 %v506, %v524
        %v546 = vadd.f32 %v507, %v524
        %v547 = vadd.f32 %v508, %v524
        %v548 = vadd.f32 %v509, %v524
        %v549 = vadd.f32 %v510, %v524
        %v550 = vadd.f32 %v511, %v524
        %v551 = vadd.f32 %v512, %v524
        %v552 = vadd.f32 %v513, %v524
        %v553 = vadd.f32 %v514, %v524
        %v554 = vadd.f32 %v515, %v524
        %v555 = vadd.f32 %v516, %v524
        %v556 = vadd.f32 %v517, %v524
        %v557 = vadd.f32 %v518, %v524
        %v558 = vsub.f32 0.0, %v526
        %v559 = vsub.f32 0.0, %v527
        %v560 = vsub.f32 0.0, %v528
        %v561 = vsub.f32 0.0, %v529
        %v562 = vsub.f32 0.0, %v530
        %v563 = vsub.f32 0.0, %v531
        %v564 = vsub.f32 0.0, %v532
        %v565 = vsub.f32 0.0, %v533
        %v566 = vsub.f32 0.0, %v534
        %v567 = vsub.f32 0.0, %v535
        %v568 = vsub.f32 0.0, %v536
        %v569 = vsub.f32 0.0, %v537
        %v570 = vsub.f32 0.0, %v538
        %v571 = vsub.f32 0.0, %v539
        %v572 = vsub.f32 0.0, %v540
        %v573 = vsub.f32 0.0, %v541
        %v574 = vsub.f32 0.0, %v542
        %v575 = vsub.f32 0.0, %v543
        %v576 = vsub.f32 0.0, %v544
        %v577 = vsub.f32 0.0, %v545
        %v578 = vsub.f32 0.0, %v546
        %v579 = vsub.f32 0.0, %v547
        %v580 = vsub.f32 0.0, %v548
        %v581 = vsub.f32 0.0, %v549
        %v582 = vsub.f32 0.0, %v550
        %v583 = vsub.f32 0.0, %v551
        %v584 = vsub.f32 0.0, %v552
        %v585 = vsub.f32 0.0, %v553
        %v586 = vsub.f32 0.0, %v554
        %v587 = vsub.f32 0.0, %v555
        %v588 = vsub.f32 0.0, %v556
        %v589 = vsub.f32 0.0, %v557
        %v590 = vmul.f32 %v558, 1.442695
        %v591 = vpow.pop %v590
        %v592 = vmul.f32 %v559, 1.442695
        %v593 = vpow.pop %v592
        %v594 = vmul.f32 %v560, 1.442695
        %v595 = vpow.pop %v594
        %v596 = vmul.f32 %v561, 1.442695
        %v597 = vpow.pop %v596
        %v598 = vmul.f32 %v562, 1.442695
        %v599 = vpow.pop %v598
        %v600 = vmul.f32 %v563, 1.442695
        %v601 = vpow.pop %v600
        %v602 = vmul.f32 %v564, 1.442695
        %v603 = vpow.pop %v602
        %v604 = vmul.f32 %v565, 1.442695
        %v605 = vpow.pop %v604
        %v606 = vmul.f32 %v566, 1.442695
        %v607 = vpow.pop %v606
        %v608 = vmul.f32 %v567, 1.442695
        %v609 = vpow.pop %v608
        %v610 = vmul.f32 %v568, 1.442695
        %v611 = vpow.pop %v610
        %v612 = vmul.f32 %v569, 1.442695
        %v613 = vpow.pop %v612
        %v614 = vmul.f32 %v570, 1.442695
        %v615 = vpow.pop %v614
        %v616 = vmul.f32 %v571, 1.442695
        %v617 = vpow.pop %v616
        %v618 = vmul.f32 %v572, 1.442695
        %v619 = vpow.pop %v618
        %v620 = vmul.f32 %v573, 1.442695
        %v621 = vpow.pop %v620
        %v622 = vmul.f32 %v574, 1.442695
        %v623 = vpow.pop %v622
        %v624 = vmul.f32 %v575, 1.442695
        %v625 = vpow.pop %v624
        %v626 = vmul.f32 %v576, 1.442695
        %v627 = vpow.pop %v626
        %v628 = vmul.f32 %v577, 1.442695
        %v629 = vpow.pop %v628
        %v630 = vmul.f32 %v578, 1.442695
        %v631 = vpow.pop %v630
        %v632 = vmul.f32 %v579, 1.442695
        %v633 = vpow.pop %v632
        %v634 = vmul.f32 %v580, 1.442695
        %v635 = vpow.pop %v634
        %v636 = vmul.f32 %v581, 1.442695
        %v637 = vpow.pop %v636
        %v638 = vmul.f32 %v582, 1.442695
        %v639 = vpow.pop %v638
        %v640 = vmul.f32 %v583, 1.442695
        %v641 = vpow.pop %v640
        %v642 = vmul.f32 %v584, 1.442695
        %v643 = vpow.pop %v642
        %v644 = vmul.f32 %v585, 1.442695
        %v645 = vpow.pop %v644
        %v646 = vmul.f32 %v586, 1.442695
        %v647 = vpow.pop %v646
        %v648 = vmul.f32 %v587, 1.442695
        %v649 = vpow.pop %v648
        %v650 = vmul.f32 %v588, 1.442695
        %v651 = vpow.pop %v650
        %v652 = vmul.f32 %v589, 1.442695
        %v653 = vpow.pop %v652
        %v654 = vadd.f32 %v591, 1.0
        %v655 = vadd.f32 %v593, 1.0
        %v656 = vadd.f32 %v595, 1.0
        %v657 = vadd.f32 %v597, 1.0
        %v658 = vadd.f32 %v599, 1.0
        %v659 = vadd.f32 %v601, 1.0
        %v660 = vadd.f32 %v603, 1.0
        %v661 = vadd.f32 %v605, 1.0
        %v662 = vadd.f32 %v607, 1.0
        %v663 = vadd.f32 %v609, 1.0
        %v664 = vadd.f32 %v611, 1.0
        %v665 = vadd.f32 %v613, 1.0
        %v666 = vadd.f32 %v615, 1.0
        %v667 = vadd.f32 %v617, 1.0
        %v668 = vadd.f32 %v619, 1.0
        %v669 = vadd.f32 %v621, 1.0
        %v670 = vadd.f32 %v623, 1.0
        %v671 = vadd.f32 %v625, 1.0
        %v672 = vadd.f32 %v627, 1.0
        %v673 = vadd.f32 %v629, 1.0
        %v674 = vadd.f32 %v631, 1.0
        %v675 = vadd.f32 %v633, 1.0
        %v676 = vadd.f32 %v635, 1.0
        %v677 = vadd.f32 %v637, 1.0
        %v678 = vadd.f32 %v639, 1.0
        %v679 = vadd.f32 %v641, 1.0
        %v680 = vadd.f32 %v643, 1.0
        %v681 = vadd.f32 %v645, 1.0
        %v682 = vadd.f32 %v647, 1.0
        %v683 = vadd.f32 %v649, 1.0
        %v684 = vadd.f32 %v651, 1.0
        %v685 = vadd.f32 %v653, 1.0
        %v686 = vrcp.pop %v654
        %v687 = vrcp.pop %v655
        %v688 = vrcp.pop %v656
        %v689 = vrcp.pop %v657
        %v690 = vrcp.pop %v658
        %v691 = vrcp.pop %v659
        %v692 = vrcp.pop %v660
        %v693 = vrcp.pop %v661
        %v694 = vrcp.pop %v662
        %v695 = vrcp.pop %v663
        %v696 = vrcp.pop %v664
        %v697 = vrcp.pop %v665
        %v698 = vrcp.pop %v666
        %v699 = vrcp.pop %v667
        %v700 = vrcp.pop %v668
        %v701 = vrcp.pop %v669
        %v702 = vrcp.pop %v670
        %v703 = vrcp.pop %v671
        %v704 = vrcp.pop %v672
        %v705 = vrcp.pop %v673
        %v706 = vrcp.pop %v674
        %v707 = vrcp.pop %v675
        %v708 = vrcp.pop %v676
        %v709 = vrcp.pop %v677
        %v710 = vrcp.pop %v678
        %v711 = vrcp.pop %v679
        %v712 = vrcp.pop %v680
        %v713 = vrcp.pop %v681
        %v714 = vrcp.pop %v682
        %v715 = vrcp.pop %v683
        %v716 = vrcp.pop %v684
        %v717 = vrcp.pop %v685
        %v718 = vmul.f32 %v526, %v686
        %v719 = vmul.f32 %v527, %v687
        %v720 = vmul.f32 %v528, %v688
        %v721 = vmul.f32 %v529, %v689
        %v722 = vmul.f32 %v530, %v690
        %v723 = vmul.f32 %v531, %v691
        %v724 = vmul.f32 %v532, %v692
        %v725 = vmul.f32 %v533, %v693
        %v726 = vmul.f32 %v534, %v694
        %v727 = vmul.f32 %v535, %v695
        %v728 = vmul.f32 %v536, %v696
        %v729 = vmul.f32 %v537, %v697
        %v730 = vmul.f32 %v538, %v698
        %v731 = vmul.f32 %v539, %v699
        %v732 = vmul.f32 %v540, %v700
        %v733 = vmul.f32 %v541, %v701
        %v734 = vmul.f32 %v542, %v702
        %v735 = vmul.f32 %v543, %v703
        %v736 = vmul.f32 %v544, %v704
        %v737 = vmul.f32 %v545, %v705
        %v738 = vmul.f32 %v546, %v706
        %v739 = vmul.f32 %v547, %v707
        %v740 = vmul.f32 %v548, %v708
        %v741 = vmul.f32 %v549, %v709
        %v742 = vmul.f32 %v550, %v710
        %v743 = vmul.f32 %v551, %v711
        %v744 = vmul.f32 %v552, %v712
        %v745 = vmul.f32 %v553, %v713
        %v746 = vmul.f32 %v554, %v714
        %v747 = vmul.f32 %v555, %v715
        %v748 = vmul.f32 %v556, %v716
        %v749 = vmul.f32 %v557, %v717
        %750 = vst [vmem:[%s191] sm:$0xff] %v718
        %751 = vst [vmem:[%s191 + $0x8] sm:$0xff] %v719
        %752 = vst [vmem:[%s191 + $0x10] sm:$0xff] %v720
        %753 = vst [vmem:[%s191 + $0x18] sm:$0xff] %v721
        %754 = vst [vmem:[%s191 + $0x20] sm:$0xff] %v722
        %755 = vst [vmem:[%s191 + $0x28] sm:$0xff] %v723
        %756 = vst [vmem:[%s191 + $0x30] sm:$0xff] %v724
        %757 = vst [vmem:[%s191 + $0x38] sm:$0xff] %v725
        %758 = vst [vmem:[%s191 + $0x40] sm:$0xff] %v726
        %759 = vst [vmem:[%s191 + $0x48] sm:$0xff] %v727
        %760 = vst [vmem:[%s191 + $0x50] sm:$0xff] %v728
        %761 = vst [vmem:[%s191 + $0x58] sm:$0xff] %v729
        %762 = vst [vmem:[%s191 + $0x60] sm:$0xff] %v730
        %763 = vst [vmem:[%s191 + $0x68] sm:$0xff] %v731
        %764 = vst [vmem:[%s191 + $0x70] sm:$0xff] %v732
        %765 = vst [vmem:[%s191 + $0x78] sm:$0xff] %v733
        %766 = vst [vmem:[%s191 + $0x80] sm:$0xff] %v734
        %767 = vst [vmem:[%s191 + $0x88] sm:$0xff] %v735
        %768 = vst [vmem:[%s191 + $0x90] sm:$0xff] %v736
        %769 = vst [vmem:[%s191 + $0x98] sm:$0xff] %v737
        %770 = vst [vmem:[%s191 + $0xa0] sm:$0xff] %v738
        %771 = vst [vmem:[%s191 + $0xa8] sm:$0xff] %v739
        %772 = vst [vmem:[%s191 + $0xb0] sm:$0xff] %v740
        %773 = vst [vmem:[%s191 + $0xb8] sm:$0xff] %v741
        %774 = vst [vmem:[%s191 + $0xc0] sm:$0xff] %v742
        %775 = vst [vmem:[%s191 + $0xc8] sm:$0xff] %v743
        %776 = vst [vmem:[%s191 + $0xd0] sm:$0xff] %v744
        %777 = vst [vmem:[%s191 + $0xd8] sm:$0xff] %v745
        %778 = vst [vmem:[%s191 + $0xe0] sm:$0xff] %v746
        %779 = vst [vmem:[%s191 + $0xe8] sm:$0xff] %v747
        %780 = vst [vmem:[%s191 + $0xf0] sm:$0xff] %v748
        %781 = vst [vmem:[%s191 + $0xf8] sm:$0xff] %v749
        %s782 = sand.u32 %s115, 1
        %s783 = scalar_lea.sflag [#allocation3], %s782
        %s784 = sand.u32 %s115, 1
        %s785 = smul.addr %s784, 256
        %s786 = scalar_lea.vmem [#allocation2], %s785
        // Predicated region
        $region37: #{matmul_affine_act.1} parent=35 // pred_check
          %p787 = pneg %p125
        $region38: #{matmul_affine_act.1} parent=35 // pred_check_branch
          %789 = sbr.rel (%p787) target = $region40
        $region39: #{matmul_affine_act.1} parent=35 // pred_region
          %s790 = smul.u32 32, %s18
          %s792 = ssub.s32 4096, 4096
          %793 = vsyncadd %s783, %s792
          %s794 = smul.addr %s790, 128
          %s795 = scalar_lea.hbm %s4, %s794
          %s796 = sshll.u32 %s786, 4
          %s797 = int_to_ptr.vmem [resolvable:$true] %s796
          %802 = dma.vmem_to_hbm [thread:$0]  %s797, 4096, %s795, %s783, 128, 128, 8
        $region40: #{matmul_affine_act.1} parent=35 // pred_fallthru
          _
      $region36: #{matmul_affine_act.1} parent=5 // pred_fallthru
        _
      %p803 = scmp.le.s32.totalorder 2, %s13
      // Predicated region
      $region41: #{matmul_affine_act.1} parent=5 // pred_check
        %p804 = pneg %p803
      $region42: #{matmul_affine_act.1} parent=5 // pred_check_branch
        %806 = sbr.rel (%p804) target = $region44
      $region43: #{matmul_affine_act.1} parent=5 // pred_region
        %s807 = ssub.s32 %s13, 2
        // Predicated region
        $region45: #{matmul_affine_act.1} parent=43 // pred_check
          %p808 = pneg %p131
        $region46: #{matmul_affine_act.1} parent=43 // pred_check_branch
          %810 = sbr.rel (%p808) target = $region48
        $region47: #{matmul_affine_act.1} parent=43 // pred_region
          %s811 = sand.u32 %s116, 1
          %s812 = scalar_lea.sflag [#allocation3], %s811
          %s813 = sand.u32 %s116, 1
          %s814 = smul.addr %s813, 256
          %s815 = scalar_lea.vmem [#allocation2], %s814
          %816 = dma.done %s812, 4096
        $region48: #{matmul_affine_act.1} parent=43 // pred_fallthru
          _
      $region44: #{matmul_affine_act.1} parent=5 // pred_fallthru
        _
    $region6: #{matmul_affine_act.1} parent=1 // loop_footer
      %s17 = sadd.s32 1, %s13
    $region7: #{matmul_affine_act.1} parent=1 // loop_footer_branch
      %12 = sbr.rel target = $region3
    $region8: #{matmul_affine_act.1} parent=1 // loop_exit
      _
    %817 = vsyncpa [#allocation3], 1
    %s818 = scalar_lea.sflag [#allocation3], 1
    %819 = vsyncpa %s818, 1

</llo_original>
